<compile_context>
chip_gen: v5e
topology: v5e:2x2
jax: 0.10.0
libtpu: 0.0.40
codegen_flags: <defaults>
</compile_context>

<pallas_src>
import jax
import jax.numpy as jnp
from jax.experimental import pallas as pl
from jax.experimental.pallas import tpu as pltpu


def _round_up(x: int, m: int) -> int:
    return (x + m - 1) // m * m


def _choose_tile_rows(rows: int, bytes_per_row: int,
                      budget: int = 8 * 1024 * 1024, max_rows: int = 512) -> int:
    """Pick a multiple-of-8 row tile whose double-buffered footprint fits the budget."""
    tile = min(max_rows, _round_up(rows, 8))
    while tile > 8 and tile * bytes_per_row > budget:
        tile = max(8, _round_up(tile // 2, 8))
    return tile


def _radix_softmax_kernel(x_ref, o_ref):
    """x_ref/o_ref: (R, tile_rows, L). Softmax over axis 0, unrolled over the R slabs."""
    R = x_ref.shape[0]
    xs = [x_ref[r].astype(jnp.float32) for r in range(R)]          # R lane-dense slabs
    m = xs[0]
    for r in range(1, R):
        m = jnp.maximum(m, xs[r])                                   # elementwise VPU max
    es = [jnp.exp(v - m) for v in xs]                               # EUP exp
    s = es[0]
    for r in range(1, R):
        s = s + es[r]                                               # elementwise VPU add
    inv = pl.reciprocal(s, approx=True)                             # EUP reciprocal
    for r in range(R):
        o_ref[r] = (es[r] * inv).astype(o_ref.dtype)


def _sigmoid_kernel(x_ref, o_ref):
    x = x_ref[...].astype(jnp.float32)
    o_ref[...] = pl.reciprocal(1.0 + jnp.exp(-x), approx=True).astype(o_ref.dtype)


def radix_softmax(x, radix: int, cardinality: int):
    """JAX/Pallas equivalent of RadixSoftmax.forward. x is NCHW (B, C, H, W)."""
    batch = x.shape[0]
    if radix > 1:
        # ---- layout glue (plain JAX; tiny pooled attention tensor) ----
        #   (B, C, H, W) -> (B, card, R, rest) -> (R, B, card*rest)
        xr = x.reshape(batch, cardinality, radix, -1)
        rest = xr.shape[-1]
        L = cardinality * rest
        x3 = jnp.transpose(xr, (2, 0, 1, 3)).reshape(radix, batch, L)

        # Pad to a lane-dense, tileable shape: lanes -> multiple of 128, rows -> tile.
        L_pad = _round_up(L, 128)
        bytes_per_row = 4 * radix * L_pad * 4          # in+out, double-buffered, f32-equiv
        tile_rows = _choose_tile_rows(batch, bytes_per_row)
        S_pad = _round_up(max(batch, tile_rows), tile_rows)
        x3 = jnp.pad(x3, ((0, 0), (0, S_pad - batch), (0, L_pad - L)))

        out = pl.pallas_call(
            _radix_softmax_kernel,
            out_shape=jax.ShapeDtypeStruct((radix, S_pad, L_pad), x.dtype),
            grid=(S_pad // tile_rows,),
            in_specs=[pl.BlockSpec((radix, tile_rows, L_pad), lambda i: (0, i, 0))],
            out_specs=pl.BlockSpec((radix, tile_rows, L_pad), lambda i: (0, i, 0)),
            compiler_params=pltpu.CompilerParams(dimension_semantics=("parallel",)),
        )(x3)

        # ---- un-pad + radix-major flatten: (R, B, L) -> (B, R*L) ----
        out = out[:, :batch, :L]
        return jnp.transpose(out, (1, 0, 2)).reshape(batch, -1)
    else:
        orig_shape = x.shape
        flat = x.reshape(batch, -1)
        N = flat.shape[1]
        N_pad = _round_up(N, 128)
        bytes_per_row = 4 * N_pad * 4
        tile_rows = _choose_tile_rows(batch, bytes_per_row)
        S_pad = _round_up(max(batch, tile_rows), tile_rows)
        flat = jnp.pad(flat, ((0, S_pad - batch), (0, N_pad - N)))

        out = pl.pallas_call(
            _sigmoid_kernel,
            out_shape=jax.ShapeDtypeStruct((S_pad, N_pad), x.dtype),
            grid=(S_pad // tile_rows,),
            in_specs=[pl.BlockSpec((tile_rows, N_pad), lambda i: (i, 0))],
            out_specs=pl.BlockSpec((tile_rows, N_pad), lambda i: (i, 0)),
            compiler_params=pltpu.CompilerParams(dimension_semantics=("parallel",)),
        )(flat)
        return out[:batch, :N].reshape(orig_shape)


def _reference(x, radix, cardinality):
    batch = x.shape[0]
    if radix > 1:
        xr = x.reshape(batch, cardinality, radix, -1)
        xr = jnp.transpose(xr, (0, 2, 1, 3))
        xr = jax.nn.softmax(xr, axis=1)
        return xr.reshape(batch, -1)
    return jax.nn.sigmoid(x)


if __name__ == "__main__":
    key = jax.random.PRNGKey(0)
    k1, k2, k3 = jax.random.split(key, 3)

    # Tolerance note: the kernel uses the EUP approximate reciprocal, so allow a
    # slightly looser tolerance than an exact-divide reference.
    TOL = dict(atol=2e-3, rtol=2e-3)

    # radix > 1 path: B=2, cardinality=2, radix=2, rchannels=8 -> C=32, spatial 1x1
    radix, cardinality, rchannels = 2, 2, 8
    B = 2
    C = radix * cardinality * rchannels
    x = jax.random.normal(k1, (B, C, 1, 1), dtype=jnp.float32)
    y = jax.block_until_ready(radix_softmax(x, radix, cardinality))
    y_ref = _reference(x, radix, cardinality)
    assert y.shape == (B, C)
    assert jnp.allclose(y, y_ref, **TOL), "radix>1 path mismatch"

    # second radix>1 config: radix=4, cardinality=1, rchannels=16, B=4 -> C=64
    radix2, card2, rch2 = 4, 1, 16
    B2 = 4
    C2 = radix2 * card2 * rch2
    x2 = jax.random.normal(k2, (B2, C2, 1, 1), dtype=jnp.float32)
    y2 = jax.block_until_ready(radix_softmax(x2, radix2, card2))
    y2_ref = _reference(x2, radix2, card2)
    assert y2.shape == (B2, C2)
    assert jnp.allclose(y2, y2_ref, **TOL), "radix=4 path mismatch"

    # radix == 1 path: sigmoid, keeps original NCHW shape
    x3 = jax.random.normal(k3, (2, 4, 1, 1), dtype=jnp.float32)
    y3 = jax.block_until_ready(radix_softmax(x3, 1, cardinality))
    assert y3.shape == x3.shape
    assert jnp.allclose(y3, jax.nn.sigmoid(x3), **TOL), "radix==1 path mismatch"

    print("KERNEL_OK")
</pallas_src>

<mosaic_0001>
module attributes {stable_mosaic.version = 11 : i64} {
  func.func @_radix_softmax_kernel(%arg0: i32, %arg1: memref<2x8x128xf32, #tpu.memory_space<vmem>>, %arg2: memref<2x8x128xf32, #tpu.memory_space<vmem>>) attributes {dimension_semantics = [#tpu.dimension_semantics<parallel>], iteration_bounds = array<i64: 1>, scalar_prefetch = 0 : i64, scratch_operands = 0 : i64, tpu.core_type = #tpu.core_type<tc>, window_params = [{transform_indices = @transform_0, window_bounds = array<i64: 2, 8, 128>}, {transform_indices = @transform_1, window_bounds = array<i64: 2, 8, 128>}]} {
    %c0 = arith.constant 0 : index
    %c0_0 = arith.constant 0 : index
    %c0_1 = arith.constant 0 : index
    %0 = vector.load %arg1[%c0, %c0_0, %c0_1] : memref<2x8x128xf32, #tpu.memory_space<vmem>>, vector<1x8x128xf32>
    %1 = vector.shape_cast %0 : vector<1x8x128xf32> to vector<8x128xf32>
    %c1 = arith.constant 1 : index
    %c0_2 = arith.constant 0 : index
    %c0_3 = arith.constant 0 : index
    %2 = vector.load %arg1[%c1, %c0_2, %c0_3] : memref<2x8x128xf32, #tpu.memory_space<vmem>>, vector<1x8x128xf32>
    %3 = vector.shape_cast %2 : vector<1x8x128xf32> to vector<8x128xf32>
    %4 = arith.maximumf %1, %3 : vector<8x128xf32>
    %5 = arith.subf %1, %4 : vector<8x128xf32>
    %6 = math.exp %5 : vector<8x128xf32>
    %7 = arith.subf %3, %4 : vector<8x128xf32>
    %8 = math.exp %7 : vector<8x128xf32>
    %9 = arith.addf %6, %8 : vector<8x128xf32>
    %10 = tpu.reciprocal %9 {approx = true} : vector<8x128xf32> -> vector<8x128xf32>
    %11 = arith.mulf %6, %10 : vector<8x128xf32>
    %c0_4 = arith.constant 0 : index
    %c0_5 = arith.constant 0 : index
    %c0_6 = arith.constant 0 : index
    %12 = vector.load %arg2[%c0_4, %c0_5, %c0_6] : memref<2x8x128xf32, #tpu.memory_space<vmem>>, vector<1x8x128xf32>
    %13 = vector.shape_cast %12 : vector<1x8x128xf32> to vector<8x128xf32>
    %14 = vector.shape_cast %11 : vector<8x128xf32> to vector<1x8x128xf32>
    tpu.vector_store %arg2[%c0_4, %c0_5, %c0_6], %14 {strides = array<i32>} : memref<2x8x128xf32, #tpu.memory_space<vmem>>, vector<1x8x128xf32>,
    %15 = arith.mulf %8, %10 : vector<8x128xf32>
    %c1_7 = arith.constant 1 : index
    %c0_8 = arith.constant 0 : index
    %c0_9 = arith.constant 0 : index
    %16 = vector.load %arg2[%c1_7, %c0_8, %c0_9] : memref<2x8x128xf32, #tpu.memory_space<vmem>>, vector<1x8x128xf32>
    %17 = vector.shape_cast %16 : vector<1x8x128xf32> to vector<8x128xf32>
    %18 = vector.shape_cast %15 : vector<8x128xf32> to vector<1x8x128xf32>
    tpu.vector_store %arg2[%c1_7, %c0_8, %c0_9], %18 {strides = array<i32>} : memref<2x8x128xf32, #tpu.memory_space<vmem>>, vector<1x8x128xf32>,
    return
  }
  func.func @transform_0(%arg0: i32) -> (i32, i32, i32) {
    %c0_i32 = arith.constant 0 : i32
    %c0_i32_0 = arith.constant 0 : i32
    %c0_i32_1 = arith.constant 0 : i32
    return %c0_i32, %arg0, %c0_i32_0 : i32, i32, i32
  }
  func.func @transform_1(%arg0: i32) -> (i32, i32, i32) {
    %c0_i32 = arith.constant 0 : i32
    %c0_i32_0 = arith.constant 0 : i32
    %c0_i32_1 = arith.constant 0 : i32
    return %c0_i32, %arg0, %c0_i32_0 : i32, i32, i32
  }
}

</mosaic_0001>

<llo_original>
// kernel: tpu_custom_call.1
$region0: #{tpu_custom_call.1}
  #allocation0 [shape = 'u32[]', space=smem, size = 0x4, offset = 0x4, fixed_abs, tag = 'smem constant byte address 0x4 - core index']
  #allocation1 [shape = 'u32[72,128]{1,0:T(1,128)}', space=vmem, size = 0x9000, scoped, tag = 'internal scratch']
  %s0 = inlined_call_operand.hbm [shape: f32[2,8,128], index: 0, kind: input, shape index: {}]
  %s1 = inlined_call_operand.hbm [shape: f32[2,8,128], index: 1, kind: output, shape index: {}]
  %s2 = sld [smem:[#allocation0]]
  $region18: #{tpu_custom_call.1} parent=0
    _
  %s4 = ssub.s32 1, %s2
  %s5 = scalar_select 0, %s4, %s2
  $region1: #{tpu_custom_call.1} parent=0
    #allocation2 [shape = 'u8[8192]{0}', space=vmem, size = 0x2000, scoped, tag = 'input window, operand 0, single buffered']
    #allocation3 [shape = 's32[1]{0}', space=sflag, size = 0x4, scoped, tag = 'scoped memory for tpu_custom_call.1']
    #allocation4 [shape = 's32[1]{0}', space=sflag, size = 0x4, scoped, tag = 'scoped memory for tpu_custom_call.1']
    #allocation5 [shape = 'u8[8192]{0}', space=vmem, size = 0x2000, scoped, tag = 'output window, operand 0, single buffered']
    %6 = vsyncpa [#allocation3], 0
    %7 = vsyncpa [#allocation4], 0
    // Predicated region
    $region2: #{tpu_custom_call.1} parent=1 // pred_check
      _
    $region3: #{tpu_custom_call.1} parent=1 // pred_check_branch
      %9 = sbr.rel (0) target = $region5
    $region4: #{tpu_custom_call.1} parent=1 // pred_region
      %11 = vsyncadd [#allocation3], 0
      %s12 = sshll.u32 %s0, 4
      %s13 = int_to_ptr.hbm [resolvable:$true] %s12
      %s14 = sshll.u32 [#allocation2], 4
      %s15 = int_to_ptr.vmem [resolvable:$true] %s14
      %20 = dma.hbm_to_vmem [thread:$0]  %s13, 256, %s15, [#allocation3], 128, 128, 8
    $region5: #{tpu_custom_call.1} parent=1 // pred_fallthru
      _
    // Predicated region
    $region6: #{tpu_custom_call.1} parent=1 // pred_check
      _
    $region7: #{tpu_custom_call.1} parent=1 // pred_check_branch
      %22 = sbr.rel (0) target = $region9
    $region8: #{tpu_custom_call.1} parent=1 // pred_region
      %24 = dma.done [#allocation3], 256
    $region9: #{tpu_custom_call.1} parent=1 // pred_fallthru
      _
    %v25 = vld [vmem:[#allocation2] sm:$0xff]
    %s26 = scalar_lea.vmem [#allocation2], 8
    %v27 = vld [vmem:[%s26] sm:$0xff]
    %v28 = vmax.f32 %v25, %v27
    %v29 = vsub.f32 %v25, %v28
    %v30 = vmul.f32 %v29, 1.442695
    %v31 = vpow.pop %v30
    %v32 = vsub.f32 %v27, %v28
    %v33 = vmul.f32 %v32, 1.442695
    %v34 = vpow.pop %v33
    %v35 = vadd.f32 %v31, %v34
    %v36 = vrcp.pop %v35
    %v37 = vmul.f32 %v31, %v36
    %38 = vst [vmem:[#allocation5] sm:$0xff] %v37
    %v39 = vmul.f32 %v34, %v36
    %s40 = scalar_lea.vmem [#allocation5], 8
    %41 = vst [vmem:[%s40] sm:$0xff] %v39
    // Predicated region
    $region10: #{tpu_custom_call.1} parent=1 // pred_check
      _
    $region11: #{tpu_custom_call.1} parent=1 // pred_check_branch
      %43 = sbr.rel (0) target = $region13
    $region12: #{tpu_custom_call.1} parent=1 // pred_region
      %45 = vsyncadd [#allocation4], 0
      %s46 = sshll.u32 [#allocation5], 4
      %s47 = int_to_ptr.vmem [resolvable:$true] %s46
      %s48 = sshll.u32 %s1, 4
      %s49 = int_to_ptr.hbm [resolvable:$true] %s48
      %54 = dma.vmem_to_hbm [thread:$0]  %s47, 256, %s49, [#allocation4], 128, 128, 8
    $region13: #{tpu_custom_call.1} parent=1 // pred_fallthru
      _
    // Predicated region
    $region14: #{tpu_custom_call.1} parent=1 // pred_check
      _
    $region15: #{tpu_custom_call.1} parent=1 // pred_check_branch
      %56 = sbr.rel (0) target = $region17
    $region16: #{tpu_custom_call.1} parent=1 // pred_region
      %58 = dma.done [#allocation4], 256
    $region17: #{tpu_custom_call.1} parent=1 // pred_fallthru
      _
    %59 = vsyncpa [#allocation3], 1
    %60 = vsyncpa [#allocation4], 1

</llo_original>
